<compile_context>
chip_gen: v7x
topology: tpu7x:2x2x1
jax: 0.10.0
libtpu: 0.0.40
codegen_flags: <defaults>
</compile_context>

<pallas_src>
import functools
import math

import jax
import jax.numpy as jnp
from jax.experimental import pallas as pl
from jax.experimental.pallas import tpu as pltpu

LANES = 128


def fused_graph_kernel(nodes_ref, edges_ref, dist_ref, mask_ref,
                       wproj_ref, wtr_ref, wc_ref, vec_ref,
                       out_ref, *, B, N, D, De, coeff, eps):
    # ---- unpack the small packed-parameter buffer (one vreg) ----
    vec = vec_ref[...]                        # (8, 128)
    b_proj = vec[0:1, 0:3 * D]                # (1, 3D)  [bq | bk | bnv]
    btr = vec[1:2, 0:2 * D]                   # (1, 2D)
    gamma = vec[2:3, 0:2 * D]                 # (1, 2D)
    beta = vec[3:4, 0:2 * D]                  # (1, 2D)
    bc = vec[4:5, :]                          # (1, 128) classifier bias (zero padded)
    wev = vec[5:6, 0:De]                      # (1, De)  EVNet weight (eFeat == 1)
    bev = vec[6:7, 0:De]                      # (1, De)

    # ---- single packed projection over all B*N rows: [Q | K | NV] ----
    x = nodes_ref[...]                                                   # (B*N, nFeat)
    proj = jnp.dot(x, wproj_ref[...],
                   preferred_element_type=jnp.float32) + b_proj          # (B*N, 3D)

    wtr = wtr_ref[...]                        # (D + De, 2D)
    wtr_n = wtr[0:D, :]                       # (D, 2D)
    wtr_e = wtr[D:, :]                        # (De, 2D)

    rows = []
    for b in range(B):                        # B is tiny & static -> unrolled, all 2-D ops
        lo, hi = b * N, (b + 1) * N
        q = proj[lo:hi, 0:D]                  # (N, D)
        k = proj[lo:hi, D:2 * D]              # (N, D)
        nv = proj[lo:hi, 2 * D:3 * D]         # (N, D)

        e2d = edges_ref[b]                    # (N, N)
        dist = dist_ref[b]                    # (N, N)
        msk = mask_ref[b]                     # (N, N) int32, nonzero == masked

        qk = jax.lax.dot_general(q, k, (((1,), (1,)), ((), ())),
                                 preferred_element_type=jnp.float32)     # (N, N)
        dist_w = pl.reciprocal(dist + 1.0, approx=True) * coeff          # fold coeff once
        w = dist_w * qk
        w = jnp.where(msk != 0, -1e30, w)

        # softmax; rows that are fully masked (row max == -1e30) are zeroed explicitly,
        # matching the torch isnan->0 trick without relying on NaN propagation.
        m = jnp.max(w, axis=-1, keepdims=True)                           # (N, 1)
        p = jnp.exp(w - m)
        s = jnp.sum(p, axis=-1, keepdims=True)
        attn = p * pl.reciprocal(s, approx=True)
        attn = jnp.where(m > -1e29, attn, 0.0)                           # (N, N)

        # node values: attn @ NV
        vals_n = jnp.dot(attn, nv, preferred_element_type=jnp.float32)   # (N, D)
        # edge values (eFeat == 1): sum_j attn * e  ->  rank-1 update with wev / bev
        s_e = jnp.sum(attn * e2d, axis=-1, keepdims=True)                # (N, 1)
        s_a = jnp.sum(attn, axis=-1, keepdims=True)                      # (N, 1)
        vals_e = s_e * wev + s_a * bev                                   # (N, De)

        # Trans(tanh([vals_n | vals_e])) split along the contraction dim -> no lane concat
        t = (jnp.dot(jnp.tanh(vals_n), wtr_n, preferred_element_type=jnp.float32)
             + jnp.dot(jnp.tanh(vals_e), wtr_e, preferred_element_type=jnp.float32)
             + btr)
        rows.append(jnp.maximum(t, 0.0))                                 # (N, 2D)

    act = jnp.concatenate(rows, axis=0)                                  # (B*N, 2D)

    # ---- BatchNorm1d (training-mode batch stats, biased variance), folded to scale/shift ----
    mean = jnp.mean(act, axis=0, keepdims=True)                          # (1, 2D)
    var = jnp.mean((act - mean) ** 2, axis=0, keepdims=True)             # (1, 2D)
    scale = gamma * jax.lax.rsqrt(var + eps)                             # (1, 2D)
    shift = beta - mean * scale                                          # (1, 2D)
    y = act * scale + shift                                              # (B*N, 2D)

    # ---- classifier: lane-dense (B*N, 128) store, sliced to nClass in the wrapper ----
    out_ref[...] = jnp.dot(y, wc_ref[...],
                           preferred_element_type=jnp.float32) + bc      # (B*N, 128)


def pack_params(params, n_class):
    """One-time packing of the 14 Linear/BN parameters into 4 lane-friendly buffers."""
    D = params["wq"].shape[1]
    De = params["wev"].shape[1]
    assert 3 * D <= LANES and 2 * D <= LANES and De <= LANES and n_class <= LANES
    w_proj = jnp.concatenate([params["wq"], params["wk"], params["wnv"]], axis=1)  # (nFeat, 3D)
    wc_pad = jnp.zeros((2 * D, LANES), jnp.float32).at[:, :n_class].set(params["wc"])
    vec = jnp.zeros((8, LANES), jnp.float32)
    vec = vec.at[0, 0:D].set(params["bq"][0])
    vec = vec.at[0, D:2 * D].set(params["bk"][0])
    vec = vec.at[0, 2 * D:3 * D].set(params["bnv"][0])
    vec = vec.at[1, 0:2 * D].set(params["btr"][0])
    vec = vec.at[2, 0:2 * D].set(params["gamma"][0])
    vec = vec.at[3, 0:2 * D].set(params["beta"][0])
    vec = vec.at[4, 0:n_class].set(params["bc"][0])
    vec = vec.at[5, 0:De].set(params["wev"][0])
    vec = vec.at[6, 0:De].set(params["bev"][0])
    return {"w_proj": w_proj, "wtr": params["wtr"], "wc_pad": wc_pad, "vec": vec}


@functools.partial(jax.jit, static_argnames=("n_class",))
def graph_classifier_forward(packed, nodes, edges, distances, mask, *, n_class):
    B, N, nFeat = nodes.shape
    assert edges.shape[-1] == 1, "edge-value rewrite assumes eFeatures == 1"
    D = packed["wc_pad"].shape[0] // 2        # nValDims == QKDims == baseFeatNum
    De = packed["wtr"].shape[0] - D
    coeff = 1.0 / math.sqrt(D)

    nodes_flat = nodes.reshape(B * N, nFeat)  # project all batches in one matmul
    edges2d = edges.reshape(B, N, N)          # drop the size-1 eFeat axis (lane-wasteful)
    mask_i = mask.astype(jnp.int32)

    vmem = pl.BlockSpec(memory_space=pltpu.MemorySpace.VMEM)
    out_pad = pl.pallas_call(
        functools.partial(fused_graph_kernel, B=B, N=N, D=D, De=De,
                          coeff=coeff, eps=1e-5),
        out_shape=jax.ShapeDtypeStruct((B * N, LANES), jnp.float32),
        in_specs=[vmem] * 8,
        out_specs=vmem,
    )(nodes_flat, edges2d, distances, mask_i,
      packed["w_proj"], packed["wtr"], packed["wc_pad"], packed["vec"])

    return out_pad[:, :n_class].reshape(B, N, n_class)


def reference_forward(params, nodes, edges, distances, mask):
    """Pure-JAX mirror of the PyTorch forward (training-mode BatchNorm)."""
    B, N, _ = nodes.shape
    coeff = 1.0 / math.sqrt(params["wq"].shape[1])
    q = nodes @ params["wq"] + params["bq"][0]
    k = nodes @ params["wk"] + params["bk"][0]
    nv = nodes @ params["wnv"] + params["bnv"][0]
    ev = edges @ params["wev"] + params["bev"][0]
    qk = jnp.einsum("bik,bjk->bij", q, k)
    w = (1.0 / (distances + 1.0)) * qk * coeff
    w = jnp.where(mask, -jnp.inf, w)
    m = jnp.max(w, axis=-1, keepdims=True)
    p = jnp.exp(w - m)
    attn = p / jnp.sum(p, axis=-1, keepdims=True)
    attn = jnp.where(jnp.isnan(attn), 0.0, attn)
    vals_n = jnp.einsum("bij,bjk->bik", attn, nv)
    vals_e = jnp.einsum("bij,bijk->bik", attn, ev)
    vals = jnp.concatenate([vals_n, vals_e], axis=-1)
    t = jnp.maximum(jnp.tanh(vals) @ params["wtr"] + params["btr"][0], 0.0)
    x = t.reshape(B * N, -1)
    mean = x.mean(0, keepdims=True)
    var = ((x - mean) ** 2).mean(0, keepdims=True)
    y = (x - mean) / jnp.sqrt(var + 1e-5) * params["gamma"][0] + params["beta"][0]
    out = y @ params["wc"] + params["bc"][0]
    return out.reshape(B, N, -1)


def init_params(key, nFeat, eFeat, baseFeatNum, edgeFeatNum, nClass):
    Dq = Dn = baseFeatNum
    De = edgeFeatNum
    ks = jax.random.split(key, 7)
    scale = lambda fan_in: 1.0 / math.sqrt(fan_in)
    return {
        "wq": jax.random.normal(ks[0], (nFeat, Dq), jnp.float32) * scale(nFeat),
        "bq": jnp.zeros((1, Dq), jnp.float32),
        "wk": jax.random.normal(ks[1], (nFeat, Dq), jnp.float32) * scale(nFeat),
        "bk": jnp.zeros((1, Dq), jnp.float32),
        "wnv": jax.random.normal(ks[2], (nFeat, Dn), jnp.float32) * scale(nFeat),
        "bnv": jnp.zeros((1, Dn), jnp.float32),
        "wev": jax.random.normal(ks[3], (eFeat, De), jnp.float32) * scale(eFeat),
        "bev": jnp.zeros((1, De), jnp.float32),
        "wtr": jax.random.normal(ks[4], (Dn + De, 2 * Dn), jnp.float32) * scale(Dn + De),
        "btr": jnp.zeros((1, 2 * Dn), jnp.float32),
        "gamma": jnp.ones((1, 2 * Dn), jnp.float32),
        "beta": jnp.zeros((1, 2 * Dn), jnp.float32),
        "wc": jax.random.normal(ks[5], (2 * Dn, nClass), jnp.float32) * scale(2 * Dn),
        "bc": jnp.zeros((1, nClass), jnp.float32),
    }


if __name__ == "__main__":
    B, N = 2, 8
    nFeat, eFeat = 12, 1          # fixed by GraphClassifier.__init__
    baseFeatNum, edgeFeatNum, nClass = 32, 8, 4

    key = jax.random.PRNGKey(0)
    kp, kn, ke, kd, km = jax.random.split(key, 5)

    params = init_params(kp, nFeat, eFeat, baseFeatNum, edgeFeatNum, nClass)
    packed = pack_params(params, nClass)

    nodes = jax.random.normal(kn, (B, N, nFeat), jnp.float32)
    edges = jax.random.normal(ke, (B, N, N, eFeat), jnp.float32)
    distances = jax.random.uniform(kd, (B, N, N), jnp.float32, 0.0, 5.0)
    mask = jax.random.bernoulli(km, 0.2, (B, N, N))

    out = graph_classifier_forward(packed, nodes, edges, distances, mask, n_class=nClass)
    out = jax.block_until_ready(out)

    ref = reference_forward(params, nodes, edges, distances, mask)
    assert out.shape == (B, N, nClass)
    assert jnp.allclose(out, ref, rtol=2e-2, atol=2e-2), "mismatch vs reference"

    # TODO(synk): BatchNorm1d running-stat updates and Dropout(p>0) are not modeled
    # (forward uses training-mode batch statistics, dropout==0 in this config).
    print("KERNEL_OK")
</pallas_src>

<mosaic_0001>
module attributes {stable_mosaic.version = 11 : i64} {
  func.func @fused_graph_kernel(%arg0: memref<16x12xf32, #tpu.memory_space<vmem>>, %arg1: memref<2x8x8xf32, #tpu.memory_space<vmem>>, %arg2: memref<2x8x8xf32, #tpu.memory_space<vmem>>, %arg3: memref<2x8x8xi32, #tpu.memory_space<vmem>>, %arg4: memref<12x96xf32, #tpu.memory_space<vmem>>, %arg5: memref<40x64xf32, #tpu.memory_space<vmem>>, %arg6: memref<64x128xf32, #tpu.memory_space<vmem>>, %arg7: memref<8x128xf32, #tpu.memory_space<vmem>>, %arg8: memref<16x128xf32, #tpu.memory_space<vmem>>) attributes {dimension_semantics = [], scalar_prefetch = 0 : i64, scratch_operands = 0 : i64, tpu.core_type = #tpu.core_type<tc>} {
    %c0 = arith.constant 0 : index
    %c0_0 = arith.constant 0 : index
    %0 = vector.load %arg7[%c0, %c0_0] : memref<8x128xf32, #tpu.memory_space<vmem>>, vector<8x128xf32>
    %1 = vector.extract_strided_slice %0 {offsets = [0, 0], sizes = [1, 96], strides = [1, 1]} : vector<8x128xf32> to vector<1x96xf32>
    %2 = vector.extract_strided_slice %0 {offsets = [1, 0], sizes = [1, 64], strides = [1, 1]} : vector<8x128xf32> to vector<1x64xf32>
    %3 = vector.extract_strided_slice %0 {offsets = [2, 0], sizes = [1, 64], strides = [1, 1]} : vector<8x128xf32> to vector<1x64xf32>
    %4 = vector.extract_strided_slice %0 {offsets = [3, 0], sizes = [1, 64], strides = [1, 1]} : vector<8x128xf32> to vector<1x64xf32>
    %5 = vector.extract_strided_slice %0 {offsets = [4, 0], sizes = [1, 128], strides = [1, 1]} : vector<8x128xf32> to vector<1x128xf32>
    %6 = vector.extract_strided_slice %0 {offsets = [5, 0], sizes = [1, 8], strides = [1, 1]} : vector<8x128xf32> to vector<1x8xf32>
    %7 = vector.extract_strided_slice %0 {offsets = [6, 0], sizes = [1, 8], strides = [1, 1]} : vector<8x128xf32> to vector<1x8xf32>
    %c0_1 = arith.constant 0 : index
    %c0_2 = arith.constant 0 : index
    %8 = vector.load %arg0[%c0_1, %c0_2] : memref<16x12xf32, #tpu.memory_space<vmem>>, vector<16x12xf32>
    %c0_3 = arith.constant 0 : index
    %c0_4 = arith.constant 0 : index
    %9 = vector.load %arg4[%c0_3, %c0_4] : memref<12x96xf32, #tpu.memory_space<vmem>>, vector<12x96xf32>
    %cst = arith.constant dense<0.000000e+00> : vector<16x96xf32>
    %10 = tpu.matmul %8, %9, %cst {dimension_numbers = #tpu.dot_dimension_numbers<[1], [0], [0], [1], [0, 0, 1, 1], [], []>} : vector<16x12xf32>, vector<12x96xf32>, vector<16x96xf32> -> vector<16x96xf32>
    %11 = vector.broadcast %1 : vector<1x96xf32> to vector<16x96xf32>
    %12 = arith.addf %10, %11 : vector<16x96xf32>
    %c0_5 = arith.constant 0 : index
    %c0_6 = arith.constant 0 : index
    %13 = vector.load %arg5[%c0_5, %c0_6] : memref<40x64xf32, #tpu.memory_space<vmem>>, vector<40x64xf32>
    %14 = vector.extract_strided_slice %13 {offsets = [0, 0], sizes = [32, 64], strides = [1, 1]} : vector<40x64xf32> to vector<32x64xf32>
    %15 = vector.extract_strided_slice %13 {offsets = [32, 0], sizes = [8, 64], strides = [1, 1]} : vector<40x64xf32> to vector<8x64xf32>
    %16 = vector.extract_strided_slice %12 {offsets = [0, 0], sizes = [8, 32], strides = [1, 1]} : vector<16x96xf32> to vector<8x32xf32>
    %17 = vector.extract_strided_slice %12 {offsets = [0, 32], sizes = [8, 32], strides = [1, 1]} : vector<16x96xf32> to vector<8x32xf32>
    %18 = vector.extract_strided_slice %12 {offsets = [0, 64], sizes = [8, 32], strides = [1, 1]} : vector<16x96xf32> to vector<8x32xf32>
    %c0_7 = arith.constant 0 : index
    %c0_8 = arith.constant 0 : index
    %c0_9 = arith.constant 0 : index
    %19 = vector.load %arg1[%c0_7, %c0_8, %c0_9] : memref<2x8x8xf32, #tpu.memory_space<vmem>>, vector<1x8x8xf32>
    %20 = vector.shape_cast %19 : vector<1x8x8xf32> to vector<8x8xf32>
    %c0_10 = arith.constant 0 : index
    %c0_11 = arith.constant 0 : index
    %c0_12 = arith.constant 0 : index
    %21 = vector.load %arg2[%c0_10, %c0_11, %c0_12] : memref<2x8x8xf32, #tpu.memory_space<vmem>>, vector<1x8x8xf32>
    %22 = vector.shape_cast %21 : vector<1x8x8xf32> to vector<8x8xf32>
    %c0_13 = arith.constant 0 : index
    %c0_14 = arith.constant 0 : index
    %c0_15 = arith.constant 0 : index
    %23 = vector.load %arg3[%c0_13, %c0_14, %c0_15] : memref<2x8x8xi32, #tpu.memory_space<vmem>>, vector<1x8x8xi32>
    %24 = vector.shape_cast %23 : vector<1x8x8xi32> to vector<8x8xi32>
    %cst_16 = arith.constant dense<0.000000e+00> : vector<8x8xf32>
    %25 = tpu.matmul %16, %17, %cst_16 {dimension_numbers = #tpu.dot_dimension_numbers<[1], [1], [0], [0], [0, 0, 1, 0], [], []>} : vector<8x32xf32>, vector<8x32xf32>, vector<8x8xf32> -> vector<8x8xf32>
    %cst_17 = arith.constant 1.000000e+00 : f32
    %26 = vector.broadcast %cst_17 : f32 to vector<8x8xf32>
    %27 = arith.addf %22, %26 : vector<8x8xf32>
    %28 = tpu.reciprocal %27 {approx = true} : vector<8x8xf32> -> vector<8x8xf32>
    %cst_18 = arith.constant 0.176776692 : f32
    %29 = vector.broadcast %cst_18 : f32 to vector<8x8xf32>
    %30 = arith.mulf %28, %29 : vector<8x8xf32>
    %31 = arith.mulf %30, %25 : vector<8x8xf32>
    %c0_i32 = arith.constant 0 : i32
    %32 = vector.broadcast %c0_i32 : i32 to vector<8x8xi32>
    %33 = arith.cmpi ne, %24, %32 : vector<8x8xi32>
    %cst_19 = arith.constant -1.000000e+30 : f32
    %34 = vector.broadcast %cst_19 : f32 to vector<8x8xf32>
    %35 = arith.select %33, %34, %31 : vector<8x8xi1>, vector<8x8xf32>
    %cst_20 = arith.constant dense<0xFF800000> : vector<8xf32>
    %36 = vector.multi_reduction <maximumf>, %35, %cst_20 [1] : vector<8x8xf32> to vector<8xf32>
    %37 = vector.shape_cast %36 : vector<8xf32> to vector<8x1xf32>
    %38 = vector.broadcast %37 : vector<8x1xf32> to vector<8x8xf32>
    %39 = arith.subf %35, %38 : vector<8x8xf32>
    %40 = math.exp %39 : vector<8x8xf32>
    %cst_21 = arith.constant dense<0.000000e+00> : vector<8xf32>
    %41 = vector.multi_reduction <add>, %40, %cst_21 [1] : vector<8x8xf32> to vector<8xf32>
    %42 = vector.shape_cast %41 : vector<8xf32> to vector<8x1xf32>
    %43 = tpu.reciprocal %42 {approx = true} : vector<8x1xf32> -> vector<8x1xf32>
    %44 = vector.broadcast %43 : vector<8x1xf32> to vector<8x8xf32>
    %45 = arith.mulf %40, %44 : vector<8x8xf32>
    %cst_22 = arith.constant -1.000000e+29 : f32
    %46 = vector.broadcast %cst_22 : f32 to vector<8x1xf32>
    %47 = arith.cmpf ogt, %37, %46 : vector<8x1xf32>
    %cst_23 = arith.constant 0.000000e+00 : f32
    %48 = vector.shape_cast %47 : vector<8x1xi1> to vector<8x1xi1>
    %49 = vector.broadcast %48 : vector<8x1xi1> to vector<8x8xi1>
    %50 = vector.broadcast %cst_23 : f32 to vector<8x8xf32>
    %51 = arith.select %49, %45, %50 : vector<8x8xi1>, vector<8x8xf32>
    %cst_24 = arith.constant dense<0.000000e+00> : vector<8x32xf32>
    %52 = tpu.matmul %51, %18, %cst_24 {dimension_numbers = #tpu.dot_dimension_numbers<[1], [0], [0], [1], [0, 0, 1, 1], [], []>} : vector<8x8xf32>, vector<8x32xf32>, vector<8x32xf32> -> vector<8x32xf32>
    %53 = arith.mulf %51, %20 : vector<8x8xf32>
    %cst_25 = arith.constant dense<0.000000e+00> : vector<8xf32>
    %54 = vector.multi_reduction <add>, %53, %cst_25 [1] : vector<8x8xf32> to vector<8xf32>
    %55 = vector.shape_cast %54 : vector<8xf32> to vector<8x1xf32>
    %cst_26 = arith.constant dense<0.000000e+00> : vector<8xf32>
    %56 = vector.multi_reduction <add>, %51, %cst_26 [1] : vector<8x8xf32> to vector<8xf32>
    %57 = vector.shape_cast %56 : vector<8xf32> to vector<8x1xf32>
    %58 = vector.broadcast %55 : vector<8x1xf32> to vector<8x8xf32>
    %59 = vector.broadcast %6 : vector<1x8xf32> to vector<8x8xf32>
    %60 = arith.mulf %58, %59 : vector<8x8xf32>
    %61 = vector.broadcast %57 : vector<8x1xf32> to vector<8x8xf32>
    %62 = vector.broadcast %7 : vector<1x8xf32> to vector<8x8xf32>
    %63 = arith.mulf %61, %62 : vector<8x8xf32>
    %64 = arith.addf %60, %63 : vector<8x8xf32>
    %65 = math.tanh %52 : vector<8x32xf32>
    %cst_27 = arith.constant dense<0.000000e+00> : vector<8x64xf32>
    %66 = tpu.matmul %65, %14, %cst_27 {dimension_numbers = #tpu.dot_dimension_numbers<[1], [0], [0], [1], [0, 0, 1, 1], [], []>} : vector<8x32xf32>, vector<32x64xf32>, vector<8x64xf32> -> vector<8x64xf32>
    %67 = math.tanh %64 : vector<8x8xf32>
    %cst_28 = arith.constant dense<0.000000e+00> : vector<8x64xf32>
    %68 = tpu.matmul %67, %15, %cst_28 {dimension_numbers = #tpu.dot_dimension_numbers<[1], [0], [0], [1], [0, 0, 1, 1], [], []>} : vector<8x8xf32>, vector<8x64xf32>, vector<8x64xf32> -> vector<8x64xf32>
    %69 = arith.addf %66, %68 : vector<8x64xf32>
    %70 = vector.broadcast %2 : vector<1x64xf32> to vector<8x64xf32>
    %71 = arith.addf %69, %70 : vector<8x64xf32>
    %cst_29 = arith.constant 0.000000e+00 : f32
    %72 = vector.broadcast %cst_29 : f32 to vector<8x64xf32>
    %73 = arith.maximumf %71, %72 : vector<8x64xf32>
    %74 = vector.extract_strided_slice %12 {offsets = [8, 0], sizes = [8, 32], strides = [1, 1]} : vector<16x96xf32> to vector<8x32xf32>
    %75 = vector.extract_strided_slice %12 {offsets = [8, 32], sizes = [8, 32], strides = [1, 1]} : vector<16x96xf32> to vector<8x32xf32>
    %76 = vector.extract_strided_slice %12 {offsets = [8, 64], sizes = [8, 32], strides = [1, 1]} : vector<16x96xf32> to vector<8x32xf32>
    %c1 = arith.constant 1 : index
    %c0_30 = arith.constant 0 : index
    %c0_31 = arith.constant 0 : index
    %77 = vector.load %arg1[%c1, %c0_30, %c0_31] : memref<2x8x8xf32, #tpu.memory_space<vmem>>, vector<1x8x8xf32>
    %78 = vector.shape_cast %77 : vector<1x8x8xf32> to vector<8x8xf32>
    %c1_32 = arith.constant 1 : index
    %c0_33 = arith.constant 0 : index
    %c0_34 = arith.constant 0 : index
    %79 = vector.load %arg2[%c1_32, %c0_33, %c0_34] : memref<2x8x8xf32, #tpu.memory_space<vmem>>, vector<1x8x8xf32>
    %80 = vector.shape_cast %79 : vector<1x8x8xf32> to vector<8x8xf32>
    %c1_35 = arith.constant 1 : index
    %c0_36 = arith.constant 0 : index
    %c0_37 = arith.constant 0 : index
    %81 = vector.load %arg3[%c1_35, %c0_36, %c0_37] : memref<2x8x8xi32, #tpu.memory_space<vmem>>, vector<1x8x8xi32>
    %82 = vector.shape_cast %81 : vector<1x8x8xi32> to vector<8x8xi32>
    %cst_38 = arith.constant dense<0.000000e+00> : vector<8x8xf32>
    %83 = tpu.matmul %74, %75, %cst_38 {dimension_numbers = #tpu.dot_dimension_numbers<[1], [1], [0], [0], [0, 0, 1, 0], [], []>} : vector<8x32xf32>, vector<8x32xf32>, vector<8x8xf32> -> vector<8x8xf32>
    %cst_39 = arith.constant 1.000000e+00 : f32
    %84 = vector.broadcast %cst_39 : f32 to vector<8x8xf32>
    %85 = arith.addf %80, %84 : vector<8x8xf32>
    %86 = tpu.reciprocal %85 {approx = true} : vector<8x8xf32> -> vector<8x8xf32>
    %cst_40 = arith.constant 0.176776692 : f32
    %87 = vector.broadcast %cst_40 : f32 to vector<8x8xf32>
    %88 = arith.mulf %86, %87 : vector<8x8xf32>
    %89 = arith.mulf %88, %83 : vector<8x8xf32>
    %c0_i32_41 = arith.constant 0 : i32
    %90 = vector.broadcast %c0_i32_41 : i32 to vector<8x8xi32>
    %91 = arith.cmpi ne, %82, %90 : vector<8x8xi32>
    %cst_42 = arith.constant -1.000000e+30 : f32
    %92 = vector.broadcast %cst_42 : f32 to vector<8x8xf32>
    %93 = arith.select %91, %92, %89 : vector<8x8xi1>, vector<8x8xf32>
    %cst_43 = arith.constant dense<0xFF800000> : vector<8xf32>
    %94 = vector.multi_reduction <maximumf>, %93, %cst_43 [1] : vector<8x8xf32> to vector<8xf32>
    %95 = vector.shape_cast %94 : vector<8xf32> to vector<8x1xf32>
    %96 = vector.broadcast %95 : vector<8x1xf32> to vector<8x8xf32>
    %97 = arith.subf %93, %96 : vector<8x8xf32>
    %98 = math.exp %97 : vector<8x8xf32>
    %cst_44 = arith.constant dense<0.000000e+00> : vector<8xf32>
    %99 = vector.multi_reduction <add>, %98, %cst_44 [1] : vector<8x8xf32> to vector<8xf32>
    %100 = vector.shape_cast %99 : vector<8xf32> to vector<8x1xf32>
    %101 = tpu.reciprocal %100 {approx = true} : vector<8x1xf32> -> vector<8x1xf32>
    %102 = vector.broadcast %101 : vector<8x1xf32> to vector<8x8xf32>
    %103 = arith.mulf %98, %102 : vector<8x8xf32>
    %cst_45 = arith.constant -1.000000e+29 : f32
    %104 = vector.broadcast %cst_45 : f32 to vector<8x1xf32>
    %105 = arith.cmpf ogt, %95, %104 : vector<8x1xf32>
    %cst_46 = arith.constant 0.000000e+00 : f32
    %106 = vector.shape_cast %105 : vector<8x1xi1> to vector<8x1xi1>
    %107 = vector.broadcast %106 : vector<8x1xi1> to vector<8x8xi1>
    %108 = vector.broadcast %cst_46 : f32 to vector<8x8xf32>
    %109 = arith.select %107, %103, %108 : vector<8x8xi1>, vector<8x8xf32>
    %cst_47 = arith.constant dense<0.000000e+00> : vector<8x32xf32>
    %110 = tpu.matmul %109, %76, %cst_47 {dimension_numbers = #tpu.dot_dimension_numbers<[1], [0], [0], [1], [0, 0, 1, 1], [], []>} : vector<8x8xf32>, vector<8x32xf32>, vector<8x32xf32> -> vector<8x32xf32>
    %111 = arith.mulf %109, %78 : vector<8x8xf32>
    %cst_48 = arith.constant dense<0.000000e+00> : vector<8xf32>
    %112 = vector.multi_reduction <add>, %111, %cst_48 [1] : vector<8x8xf32> to vector<8xf32>
    %113 = vector.shape_cast %112 : vector<8xf32> to vector<8x1xf32>
    %cst_49 = arith.constant dense<0.000000e+00> : vector<8xf32>
    %114 = vector.multi_reduction <add>, %109, %cst_49 [1] : vector<8x8xf32> to vector<8xf32>
    %115 = vector.shape_cast %114 : vector<8xf32> to vector<8x1xf32>
    %116 = vector.broadcast %113 : vector<8x1xf32> to vector<8x8xf32>
    %117 = vector.broadcast %6 : vector<1x8xf32> to vector<8x8xf32>
    %118 = arith.mulf %116, %117 : vector<8x8xf32>
    %119 = vector.broadcast %115 : vector<8x1xf32> to vector<8x8xf32>
    %120 = vector.broadcast %7 : vector<1x8xf32> to vector<8x8xf32>
    %121 = arith.mulf %119, %120 : vector<8x8xf32>
    %122 = arith.addf %118, %121 : vector<8x8xf32>
    %123 = math.tanh %110 : vector<8x32xf32>
    %cst_50 = arith.constant dense<0.000000e+00> : vector<8x64xf32>
    %124 = tpu.matmul %123, %14, %cst_50 {dimension_numbers = #tpu.dot_dimension_numbers<[1], [0], [0], [1], [0, 0, 1, 1], [], []>} : vector<8x32xf32>, vector<32x64xf32>, vector<8x64xf32> -> vector<8x64xf32>
    %125 = math.tanh %122 : vector<8x8xf32>
    %cst_51 = arith.constant dense<0.000000e+00> : vector<8x64xf32>
    %126 = tpu.matmul %125, %15, %cst_51 {dimension_numbers = #tpu.dot_dimension_numbers<[1], [0], [0], [1], [0, 0, 1, 1], [], []>} : vector<8x8xf32>, vector<8x64xf32>, vector<8x64xf32> -> vector<8x64xf32>
    %127 = arith.addf %124, %126 : vector<8x64xf32>
    %128 = vector.broadcast %2 : vector<1x64xf32> to vector<8x64xf32>
    %129 = arith.addf %127, %128 : vector<8x64xf32>
    %cst_52 = arith.constant 0.000000e+00 : f32
    %130 = vector.broadcast %cst_52 : f32 to vector<8x64xf32>
    %131 = arith.maximumf %129, %130 : vector<8x64xf32>
    %132 = tpu.concatenate %73, %131 in 0 : vector<8x64xf32>, vector<8x64xf32> -> vector<16x64xf32>
    %cst_53 = arith.constant dense<0.000000e+00> : vector<64xf32>
    %133 = vector.multi_reduction <add>, %132, %cst_53 [0] : vector<16x64xf32> to vector<64xf32>
    %134 = vector.shape_cast %133 : vector<64xf32> to vector<1x64xf32>
    %cst_54 = arith.constant 1.600000e+01 : f32
    %135 = vector.broadcast %cst_54 : f32 to vector<1x64xf32>
    %136 = arith.divf %134, %135 : vector<1x64xf32>
    %137 = vector.broadcast %136 : vector<1x64xf32> to vector<16x64xf32>
    %138 = arith.subf %132, %137 : vector<16x64xf32>
    %139 = arith.mulf %138, %138 : vector<16x64xf32>
    %cst_55 = arith.constant dense<0.000000e+00> : vector<64xf32>
    %140 = vector.multi_reduction <add>, %139, %cst_55 [0] : vector<16x64xf32> to vector<64xf32>
    %141 = vector.shape_cast %140 : vector<64xf32> to vector<1x64xf32>
    %cst_56 = arith.constant 1.600000e+01 : f32
    %142 = vector.broadcast %cst_56 : f32 to vector<1x64xf32>
    %143 = arith.divf %141, %142 : vector<1x64xf32>
    %cst_57 = arith.constant 9.99999974E-6 : f32
    %144 = vector.broadcast %cst_57 : f32 to vector<1x64xf32>
    %145 = arith.addf %143, %144 : vector<1x64xf32>
    %146 = math.rsqrt %145 : vector<1x64xf32>
    %147 = arith.mulf %3, %146 : vector<1x64xf32>
    %148 = arith.mulf %136, %147 : vector<1x64xf32>
    %149 = arith.subf %4, %148 : vector<1x64xf32>
    %150 = vector.broadcast %147 : vector<1x64xf32> to vector<16x64xf32>
    %151 = arith.mulf %132, %150 : vector<16x64xf32>
    %152 = vector.broadcast %149 : vector<1x64xf32> to vector<16x64xf32>
    %153 = arith.addf %151, %152 : vector<16x64xf32>
    %c0_58 = arith.constant 0 : index
    %c0_59 = arith.constant 0 : index
    %154 = vector.load %arg6[%c0_58, %c0_59] : memref<64x128xf32, #tpu.memory_space<vmem>>, vector<64x128xf32>
    %cst_60 = arith.constant dense<0.000000e+00> : vector<16x128xf32>
    %155 = tpu.matmul %153, %154, %cst_60 {dimension_numbers = #tpu.dot_dimension_numbers<[1], [0], [0], [1], [0, 0, 1, 1], [], []>} : vector<16x64xf32>, vector<64x128xf32>, vector<16x128xf32> -> vector<16x128xf32>
    %156 = vector.broadcast %5 : vector<1x128xf32> to vector<16x128xf32>
    %157 = arith.addf %155, %156 : vector<16x128xf32>
    %c0_61 = arith.constant 0 : index
    %c0_62 = arith.constant 0 : index
    %158 = vector.load %arg8[%c0_61, %c0_62] : memref<16x128xf32, #tpu.memory_space<vmem>>, vector<16x128xf32>
    tpu.vector_store %arg8[%c0_61, %c0_62], %157 {strides = array<i32>} : memref<16x128xf32, #tpu.memory_space<vmem>>, vector<16x128xf32>,
    return
  }
}

</mosaic_0001>

<llo_original>
// kernel: graph_classifier_forward.1
$region0: #{graph_classifier_forward.1}
  #allocation0 [shape = 'u32[]', space=smem, size = 0x4, offset = 0x4, fixed_abs, tag = 'smem constant byte address 0x4 - core index']
  #allocation1 [shape = 'u32[144,128]{1,0:T(1,128)}', space=vmem, size = 0x12000, scoped, tag = 'internal scratch']
  %s0 = inlined_call_operand.vmem [shape: f32[16,12], index: 0, kind: input, shape index: {}]
  %s1 = inlined_call_operand.vmem [shape: f32[2,8,8], index: 1, kind: input, shape index: {}]
  %s2 = inlined_call_operand.vmem [shape: f32[2,8,8], index: 2, kind: input, shape index: {}]
  %s3 = inlined_call_operand.vmem [shape: s32[2,8,8], index: 3, kind: input, shape index: {}]
  %s4 = inlined_call_operand.hbm [shape: f32[12,96], index: 4, kind: input, shape index: {}]
  %s5 = inlined_call_operand.hbm [shape: f32[40,64], index: 5, kind: input, shape index: {}]
  %s6 = inlined_call_operand.hbm [shape: f32[64,128], index: 6, kind: input, shape index: {}]
  %s7 = inlined_call_operand.hbm [shape: f32[8,128], index: 7, kind: input, shape index: {}]
  %s8 = inlined_call_operand.vmem [shape: f32[16,128], index: 8, kind: output, shape index: {}]
  %s9 = sld [smem:[#allocation0]]
  $region58: #{graph_classifier_forward.1} parent=0
    _
  %s11 = ssub.s32 1, %s9
  %s12 = scalar_select 0, %s11, %s9
  $region1: #{graph_classifier_forward.1} parent=0
    #allocation2 [shape = 'u8[8192]{0}', space=vmem, size = 0x2000, scoped, tag = 'input window, operand 4, single buffered']
    #allocation3 [shape = 's32[1]{0}', space=sflag, size = 0x4, scoped, tag = 'scoped memory for graph_classifier_forward.1']
    #allocation4 [shape = 'u8[20480]{0}', space=vmem, size = 0x5000, scoped, tag = 'input window, operand 5, single buffered']
    #allocation5 [shape = 's32[1]{0}', space=sflag, size = 0x4, scoped, tag = 'scoped memory for graph_classifier_forward.1']
    #allocation6 [shape = 'u8[32768]{0}', space=vmem, size = 0x8000, scoped, tag = 'input window, operand 6, single buffered']
    #allocation7 [shape = 'u8[4096]{0}', space=vmem, size = 0x1000, scoped, tag = 'input window, operand 7, single buffered']
    #allocation8 [shape = 's32[1]{0}', space=sflag, size = 0x4, scoped, tag = 'scoped memory for graph_classifier_forward.1']
    %13 = vsyncpa [#allocation3], 0
    %14 = vsyncpa [#allocation5], 0
    %15 = vsyncpa [#allocation8], 0
    // Predicated region
    $region2: #{graph_classifier_forward.1} parent=1 // pred_check
      _
    $region3: #{graph_classifier_forward.1} parent=1 // pred_check_branch
      %17 = sbr.rel (0) target = $region5
    $region4: #{graph_classifier_forward.1} parent=1 // pred_region
      _
    $region5: #{graph_classifier_forward.1} parent=1 // pred_fallthru
      _
    // Predicated region
    $region6: #{graph_classifier_forward.1} parent=1 // pred_check
      _
    $region7: #{graph_classifier_forward.1} parent=1 // pred_check_branch
      %19 = sbr.rel (0) target = $region9
    $region8: #{graph_classifier_forward.1} parent=1 // pred_region
      _
    $region9: #{graph_classifier_forward.1} parent=1 // pred_fallthru
      _
    // Predicated region
    $region10: #{graph_classifier_forward.1} parent=1 // pred_check
      _
    $region11: #{graph_classifier_forward.1} parent=1 // pred_check_branch
      %21 = sbr.rel (0) target = $region13
    $region12: #{graph_classifier_forward.1} parent=1 // pred_region
      _
    $region13: #{graph_classifier_forward.1} parent=1 // pred_fallthru
      _
    // Predicated region
    $region14: #{graph_classifier_forward.1} parent=1 // pred_check
      _
    $region15: #{graph_classifier_forward.1} parent=1 // pred_check_branch
      %23 = sbr.rel (0) target = $region17
    $region16: #{graph_classifier_forward.1} parent=1 // pred_region
      _
    $region17: #{graph_classifier_forward.1} parent=1 // pred_fallthru
      _
    // Predicated region
    $region18: #{graph_classifier_forward.1} parent=1 // pred_check
      _
    $region19: #{graph_classifier_forward.1} parent=1 // pred_check_branch
      %25 = sbr.rel (0) target = $region21
    $region20: #{graph_classifier_forward.1} parent=1 // pred_region
      %s27 = ssub.s32 256, 256
      %28 = vsyncadd [#allocation3], %s27
      %s29 = sshll.u32 [#allocation2], 4
      %s30 = int_to_ptr.vmem [resolvable:$true] %s29
      %35 = dma.hbm_to_vmem [thread:$0]  %s4, 256, %s30, [#allocation3], 128, 128, 8
    $region21: #{graph_classifier_forward.1} parent=1 // pred_fallthru
      _
    // Predicated region
    $region22: #{graph_classifier_forward.1} parent=1 // pred_check
      _
    $region23: #{graph_classifier_forward.1} parent=1 // pred_check_branch
      %37 = sbr.rel (0) target = $region25
    $region24: #{graph_classifier_forward.1} parent=1 // pred_region
      %s39 = ssub.s32 640, 640
      %40 = vsyncadd [#allocation5], %s39
      %s41 = sshll.u32 [#allocation4], 4
      %s42 = int_to_ptr.vmem [resolvable:$true] %s41
      %47 = dma.hbm_to_vmem [thread:$0]  %s5, 640, %s42, [#allocation5], 128, 128, 8
    $region25: #{graph_classifier_forward.1} parent=1 // pred_fallthru
      _
    // Predicated region
    $region26: #{graph_classifier_forward.1} parent=1 // pred_check
      _
    $region27: #{graph_classifier_forward.1} parent=1 // pred_check_branch
      %49 = sbr.rel (0) target = $region29
    $region28: #{graph_classifier_forward.1} parent=1 // pred_region
      %s51 = ssub.s32 1024, 1024
      %52 = vsyncadd [#allocation5], %s51
      %s53 = sshll.u32 [#allocation6], 4
      %s54 = int_to_ptr.vmem [resolvable:$true] %s53
      %59 = dma.hbm_to_vmem [thread:$0]  %s6, 1024, %s54, [#allocation5], 128, 128, 8
    $region29: #{graph_classifier_forward.1} parent=1 // pred_fallthru
      _
    // Predicated region
    $region30: #{graph_classifier_forward.1} parent=1 // pred_check
      _
    $region31: #{graph_classifier_forward.1} parent=1 // pred_check_branch
      %61 = sbr.rel (0) target = $region33
    $region32: #{graph_classifier_forward.1} parent=1 // pred_region
      %s63 = ssub.s32 128, 128
      %64 = vsyncadd [#allocation8], %s63
      %s66 = sshll.u32 [#allocation7], 4
      %s67 = int_to_ptr.vmem [resolvable:$true] %s66
      %69 = dma.hbm_to_vmem [thread:$0]  %s7, 128, %s67, [#allocation8]
    $region33: #{graph_classifier_forward.1} parent=1 // pred_fallthru
      _
    // Predicated region
    $region34: #{graph_classifier_forward.1} parent=1 // pred_check
      _
    $region35: #{graph_classifier_forward.1} parent=1 // pred_check_branch
      %71 = sbr.rel (0) target = $region37
    $region36: #{graph_classifier_forward.1} parent=1 // pred_region
      %72 = dma.done [#allocation3], 256
    $region37: #{graph_classifier_forward.1} parent=1 // pred_fallthru
      _
    // Predicated region
    $region38: #{graph_classifier_forward.1} parent=1 // pred_check
      _
    $region39: #{graph_classifier_forward.1} parent=1 // pred_check_branch
      %74 = sbr.rel (0) target = $region41
    $region40: #{graph_classifier_forward.1} parent=1 // pred_region
      %75 = dma.done [#allocation5], 640
    $region41: #{graph_classifier_forward.1} parent=1 // pred_fallthru
      _
    // Predicated region
    $region42: #{graph_classifier_forward.1} parent=1 // pred_check
      _
    $region43: #{graph_classifier_forward.1} parent=1 // pred_check_branch
      %77 = sbr.rel (0) target = $region45
    $region44: #{graph_classifier_forward.1} parent=1 // pred_region
      %78 = dma.done [#allocation5], 1024
    $region45: #{graph_classifier_forward.1} parent=1 // pred_fallthru
      _
    // Predicated region
    $region46: #{graph_classifier_forward.1} parent=1 // pred_check
      _
    $region47: #{graph_classifier_forward.1} parent=1 // pred_check_branch
      %80 = sbr.rel (0) target = $region49
    $region48: #{graph_classifier_forward.1} parent=1 // pred_region
      %81 = dma.done [#allocation8], 128
    $region49: #{graph_classifier_forward.1} parent=1 // pred_fallthru
      _
    %v82 = vld [vmem:[#allocation7] sm:$0xff]
    %v83 = vld [vmem:[%s0] sm:$0xff]
    %v84 = vld [vmem:[%s0 + $0x8] sm:$0xff]
    %v85 = vld [vmem:[#allocation2] sm:$0xff]
    %v86 = vld [vmem:[#allocation2 + $0x8] sm:$0xf]
    %v87 = vlaneseq
    %v88 = vshrl.u32 %v87, 7
    %v89 = vsub.s32 0, %v88
    %v90 = vrot.slane %v82, %v89
    %vm91 = vcmask 97280
    %v93 = vsel %vm91, %v83, 0
    %v96 = vsel %vm91, %v84, 0
    %vm98 = vcmask 1043456
    %v100 = vsel %vm98, %v86, 0
    %102 = vmatprep.subr.mxu0 0.0
    %103 = vmatpush1.msra.mxu0 %v85
    %104 = vmatprep.subr.mxu0 0.0
    %105 = vmatpush1.msra.mxu0 %v100
    %106 = vmatprep.subr.mxu0 0.0
    %107 = vmatpush1.msra.mxu0 0.0
    %108 = vmatprep.subr.mxu0 0.0
    %109 = vmatpush1.msra.mxu0 0.0
    %110 = vmatprep.subr.mxu0 0.0
    %111 = vmatpush1.msra.mxu0 0.0
    %112 = vmatprep.subr.mxu0 0.0
    %113 = vmatpush1.msra.mxu0 0.0
    %114 = vmatprep.subr.mxu0 0.0
    %115 = vmatpush1.msra.mxu0 0.0
    %116 = vmatprep.subr.mxu0 0.0
    %117 = vmatpush1.msra.mxu0 0.0
    %118 = vmatprep.subr.mxu0 0.0
    %119 = vmatpush1.msra.mxu0 0.0
    %120 = vmatprep.subr.mxu0 0.0
    %121 = vmatpush1.msra.mxu0 0.0
    %122 = vmatprep.subr.mxu0 0.0
    %123 = vmatpush1.msra.mxu0 0.0
    %124 = vmatprep.subr.mxu0 0.0
    %125 = vmatpush1.msra.mxu0 0.0
    %126 = vmatprep.subr.mxu0 0.0
    %127 = vmatpush1.msra.mxu0 0.0
    %128 = vmatprep.subr.mxu0 0.0
    %129 = vmatpush1.msra.mxu0 0.0
    %130 = vmatprep.subr.mxu0 0.0
    %131 = vmatpush1.msra.mxu0 0.0
    %132 = vmatprep.subr.mxu0 0.0
    %133 = vmatpush1.msra.mxu0 0.0
    %134 = vmatprep.subr.mxu0 0.0
    %135 = vmatpush1.msra.mxu0 0.0
    %136 = vmatprep.subr.mxu0 0.0
    %137 = vmatpush1.msra.mxu0 0.0
    %138 = vmatprep.subr.mxu0 0.0
    %139 = vmatpush1.msra.mxu0 0.0
    %140 = vmatprep.subr.mxu0 0.0
    %141 = vmatpush1.msra.mxu0 0.0
    %142 = vmatprep.subr.mxu0 0.0
    %143 = vmatpush1.msra.mxu0 0.0
    %144 = vmatprep.subr.mxu0 0.0
    %145 = vmatpush1.msra.mxu0 0.0
    %146 = vmatprep.subr.mxu0 0.0
    %147 = vmatpush1.msra.mxu0 0.0
    %148 = vmatprep.subr.mxu0 0.0
    %149 = vmatpush1.msra.mxu0 0.0
    %150 = vmatprep.subr.mxu0 0.0
    %151 = vmatpush1.msra.mxu0 0.0
    %152 = vmatprep.subr.mxu0 0.0
    %153 = vmatpush1.msra.mxu0 0.0
    %154 = vmatprep.subr.mxu0 0.0
    %155 = vmatpush1.msra.mxu0 0.0
    %156 = vmatprep.subr.mxu0 0.0
    %157 = vmatpush1.msra.mxu0 0.0
    %158 = vmatprep.subr.mxu0 0.0
    %159 = vmatpush1.msra.mxu0 0.0
    %160 = vmatprep.subr.mxu0 0.0
    %161 = vmatpush1.msra.mxu0 0.0
    %162 = vmatprep.subr.mxu0 0.0
    %163 = vmatpush1.msra.mxu0 0.0
    %164 = vmatprep.subr.mxu0 0.0
    %165 = vmatpush1.msra.mxu0 0.0
    %166 = vmatprep.mubr.f32.mxu0 0.0
    %167 = vmatmul.mubr.f32.gmra.mrb[0].mxu0 %v93
    %v168 = vpop.f32.mrb[0].mxu0
    %v169 = vadd.f32 %v90, %v168
    %v170 = vpop.f32.mrb[0].mxu0
    %171 = vmatprep.mubr.f32.mxu0 0.0
    %172 = vmatmul.mubr.f32.gmra.mrb[0].mxu0 %v96
    %v173 = vpop.f32.mrb[0].mxu0
    %v174 = vadd.f32 %v90, %v173
    %v175 = vpop.f32.mrb[0].mxu0
    %176 = vdwg.mxu0
    %v177 = vld [vmem:[#allocation4] sm:$0xff]
    %v178 = vld [vmem:[#allocation4 + $0x8] sm:$0xff]
    %v179 = vld [vmem:[#allocation4 + $0x10] sm:$0xff]
    %v180 = vld [vmem:[#allocation4 + $0x18] sm:$0xff]
    %v181 = vld [vmem:[#allocation4 + $0x20] sm:$0xff]
    %v182 = vld [vmem:[%s1] sm:$0xff]
    %v183 = vld [vmem:[%s2] sm:$0xff]
    %v184 = vld [vmem:[%s3] sm:$0xff]
    %186 = vrot.lane.b32.xlu0 %v169, 96
    %v187 = vpop.permute.xlu0 %186
    %vm188 = vcmask 261120
    %v189 = vsel %vm188, %v169, 0
    %v191 = vsel %vm188, %v187, 0
    %193 = vmatprep.subr.mxu0 0.0
    %194 = vmatpush1.xpose.msra.mxu0 %v191
    %195 = vmatprep.subr.mxu0 0.0
    %196 = vmatpush1.xpose.msra.mxu0 0.0
    %197 = vmatprep.subr.mxu0 0.0
    %198 = vmatpush1.xpose.msra.mxu0 0.0
    %199 = vmatprep.subr.mxu0 0.0
    %200 = vmatpush1.xpose.msra.mxu0 0.0
    %201 = vmatprep.subr.mxu0 0.0
    %202 = vmatpush1.xpose.msra.mxu0 0.0
    %203 = vmatprep.subr.mxu0 0.0
    %204 = vmatpush1.xpose.msra.mxu0 0.0
    %205 = vmatprep.subr.mxu0 0.0
    %206 = vmatpush1.xpose.msra.mxu0 0.0
    %207 = vmatprep.subr.mxu0 0.0
    %208 = vmatpush1.xpose.msra.mxu0 0.0
    %209 = vmatprep.subr.mxu0 0.0
    %210 = vmatpush1.xpose.msra.mxu0 0.0
    %211 = vmatprep.subr.mxu0 0.0
    %212 = vmatpush1.xpose.msra.mxu0 0.0
    %213 = vmatprep.subr.mxu0 0.0
    %214 = vmatpush1.xpose.msra.mxu0 0.0
    %215 = vmatprep.subr.mxu0 0.0
    %216 = vmatpush1.xpose.msra.mxu0 0.0
    %217 = vmatprep.subr.mxu0 0.0
    %218 = vmatpush1.xpose.msra.mxu0 0.0
    %219 = vmatprep.subr.mxu0 0.0
    %220 = vmatpush1.xpose.msra.mxu0 0.0
    %221 = vmatprep.subr.mxu0 0.0
    %222 = vmatpush1.xpose.msra.mxu0 0.0
    %223 = vmatprep.subr.mxu0 0.0
    %224 = vmatpush1.xpose.msra.mxu0 0.0
    %225 = vmatprep.subr.mxu0 0.0
    %226 = vmatpush1.xpose.msra.mxu0 0.0
    %227 = vmatprep.subr.mxu0 0.0
    %228 = vmatpush1.xpose.msra.mxu0 0.0
    %229 = vmatprep.subr.mxu0 0.0
    %230 = vmatpush1.xpose.msra.mxu0 0.0
    %231 = vmatprep.subr.mxu0 0.0
    %232 = vmatpush1.xpose.msra.mxu0 0.0
    %233 = vmatprep.subr.mxu0 0.0
    %234 = vmatpush1.xpose.msra.mxu0 0.0
    %235 = vmatprep.subr.mxu0 0.0
    %236 = vmatpush1.xpose.msra.mxu0 0.0
    %237 = vmatprep.subr.mxu0 0.0
    %238 = vmatpush1.xpose.msra.mxu0 0.0
    %239 = vmatprep.subr.mxu0 0.0
    %240 = vmatpush1.xpose.msra.mxu0 0.0
    %241 = vmatprep.subr.mxu0 0.0
    %242 = vmatpush1.xpose.msra.mxu0 0.0
    %243 = vmatprep.subr.mxu0 0.0
    %244 = vmatpush1.xpose.msra.mxu0 0.0
    %245 = vmatprep.subr.mxu0 0.0
    %246 = vmatpush1.xpose.msra.mxu0 0.0
    %247 = vmatprep.subr.mxu0 0.0
    %248 = vmatpush1.xpose.msra.mxu0 0.0
    %249 = vmatprep.subr.mxu0 0.0
    %250 = vmatpush1.xpose.msra.mxu0 0.0
    %251 = vmatprep.subr.mxu0 0.0
    %252 = vmatpush1.xpose.msra.mxu0 0.0
    %253 = vmatprep.subr.mxu0 0.0
    %254 = vmatpush1.xpose.msra.mxu0 0.0
    %255 = vmatprep.subr.mxu0 0.0
    %256 = vmatpush1.xpose.msra.mxu0 0.0
    %257 = vmatprep.mubr.f32.mxu0 0.0
    %258 = vmatmul.mubr.f32.gmra.mrb[0].mxu0 %v189
    %v259 = vpop.f32.mrb[0].mxu0
    %v260 = vadd.f32 0.0, %v259
    %v261 = vpop.f32.mrb[0].mxu0
    %262 = vdwg.mxu0
    %v263 = vadd.f32 %v183, 1.0
    %v264 = vrcp.pop %v263
    %v265 = vmul.f32 %v264, 0.17677669
    %v266 = vmul.f32 %v265, %v260
    %vm267 = vcmp.ne.s32.totalorder %v184, 0
    %v268 = vsel %vm267, -1e+30, %v266
    %vm269 = vcmask 64512
    %v270 = vsel %vm269, %v268, -inf
    %271 = vmax.xlane.f32.xlu0 %v270
    %v272 = vpop.xlane.xlu0 %271
    %v273 = vsub.f32 %v268, %v272
    %v274 = vmul.f32 %v273, 1.442695
    %v275 = vpow.pop %v274
    %v276 = vsel %vm269, %v275, 0.0
    %277 = vadd.xlane.f32.xlu0 %v276
    %v278 = vpop.xlane.xlu0 %277
    %v279 = vrcp.pop %v278
    %v280 = vmul.f32 %v275, %v279
    %vm281 = vcmp.gt.f32.partialorder %v272, -1e+29
    %v282 = vsel %vm281, 1, 0
    %vm283 = vcmp.eq.s32.totalorder %v282, 1
    %v284 = vsel %vm283, %v280, 0.0
    %285 = vrot.lane.b32.xlu0 %v169, 64
    %v286 = vpop.permute.xlu0 %285
    %v289 = vsel %vm269, %v284, 0
    %291 = vmatprep.subr.mxu0 0.0
    %292 = vmatpush1.msra.mxu0 %v286
    %293 = vmatprep.subr.mxu0 0.0
    %294 = vmatpush1.msra.mxu0 0.0
    %295 = vmatprep.subr.mxu0 0.0
    %296 = vmatpush1.msra.mxu0 0.0
    %297 = vmatprep.subr.mxu0 0.0
    %298 = vmatpush1.msra.mxu0 0.0
    %299 = vmatprep.subr.mxu0 0.0
    %300 = vmatpush1.msra.mxu0 0.0
    %301 = vmatprep.subr.mxu0 0.0
    %302 = vmatpush1.msra.mxu0 0.0
    %303 = vmatprep.subr.mxu0 0.0
    %304 = vmatpush1.msra.mxu0 0.0
    %305 = vmatprep.subr.mxu0 0.0
    %306 = vmatpush1.msra.mxu0 0.0
    %307 = vmatprep.subr.mxu0 0.0
    %308 = vmatpush1.msra.mxu0 0.0
    %309 = vmatprep.subr.mxu0 0.0
    %310 = vmatpush1.msra.mxu0 0.0
    %311 = vmatprep.subr.mxu0 0.0
    %312 = vmatpush1.msra.mxu0 0.0
    %313 = vmatprep.subr.mxu0 0.0
    %314 = vmatpush1.msra.mxu0 0.0
    %315 = vmatprep.subr.mxu0 0.0
    %316 = vmatpush1.msra.mxu0 0.0
    %317 = vmatprep.subr.mxu0 0.0
    %318 = vmatpush1.msra.mxu0 0.0
    %319 = vmatprep.subr.mxu0 0.0
    %320 = vmatpush1.msra.mxu0 0.0
    %321 = vmatprep.subr.mxu0 0.0
    %322 = vmatpush1.msra.mxu0 0.0
    %323 = vmatprep.subr.mxu0 0.0
    %324 = vmatpush1.msra.mxu0 0.0
    %325 = vmatprep.subr.mxu0 0.0
    %326 = vmatpush1.msra.mxu0 0.0
    %327 = vmatprep.subr.mxu0 0.0
    %328 = vmatpush1.msra.mxu0 0.0
    %329 = vmatprep.subr.mxu0 0.0
    %330 = vmatpush1.msra.mxu0 0.0
    %331 = vmatprep.subr.mxu0 0.0
    %332 = vmatpush1.msra.mxu0 0.0
    %333 = vmatprep.subr.mxu0 0.0
    %334 = vmatpush1.msra.mxu0 0.0
    %335 = vmatprep.subr.mxu0 0.0
    %336 = vmatpush1.msra.mxu0 0.0
    %337 = vmatprep.subr.mxu0 0.0
    %338 = vmatpush1.msra.mxu0 0.0
    %339 = vmatprep.subr.mxu0 0.0
    %340 = vmatpush1.msra.mxu0 0.0
    %341 = vmatprep.subr.mxu0 0.0
    %342 = vmatpush1.msra.mxu0 0.0
    %343 = vmatprep.subr.mxu0 0.0
    %344 = vmatpush1.msra.mxu0 0.0
    %345 = vmatprep.subr.mxu0 0.0
    %346 = vmatpush1.msra.mxu0 0.0
    %347 = vmatprep.subr.mxu0 0.0
    %348 = vmatpush1.msra.mxu0 0.0
    %349 = vmatprep.subr.mxu0 0.0
    %350 = vmatpush1.msra.mxu0 0.0
    %351 = vmatprep.subr.mxu0 0.0
    %352 = vmatpush1.msra.mxu0 0.0
    %353 = vmatprep.subr.mxu0 0.0
    %354 = vmatpush1.msra.mxu0 0.0
    %355 = vmatprep.mubr.f32.mxu0 0.0
    %356 = vmatmul.mubr.f32.gmra.mrb[0].mxu0 %v289
    %v357 = vpop.f32.mrb[0].mxu0
    %v358 = vadd.f32 0.0, %v357
    %v359 = vpop.f32.mrb[0].mxu0
    %360 = vdwg.mxu0
    %v361 = vmul.f32 %v284, %v182
    %v362 = vsel %vm269, %v361, 0.0
    %363 = vadd.xlane.f32.xlu0 %v362
    %v364 = vpop.xlane.xlu0 %363
    %v365 = vsel %vm269, %v284, 0.0
    %366 = vadd.xlane.f32.xlu0 %v365
    %v367 = vpop.xlane.xlu0 %366
    %v368 = vlaneseq
    %v369 = vshrl.u32 %v368, 7
    %v370 = vsub.s32 5, %v369
    %v371 = vrot.slane %v82, %v370
    %v372 = vmul.f32 %v364, %v371
    %v373 = vlaneseq
    %v374 = vshrl.u32 %v373, 7
    %v375 = vsub.s32 6, %v374
    %v376 = vrot.slane %v82, %v375
    %v377 = vmul.f32 %v367, %v376
    %v378 = vadd.f32 %v372, %v377
    %v379 = vtanh.pop %v358
    %v380 = vtanh.pop %v378
    %v382 = vsel %vm269, %v380, 0
    %384 = vmatprep.subr.mxu0 0.0
    %385 = vmatpush1.msra.mxu0 %v181
    %386 = vmatprep.subr.mxu0 0.0
    %387 = vmatpush1.msra.mxu0 0.0
    %388 = vmatprep.subr.mxu0 0.0
    %389 = vmatpush1.msra.mxu0 0.0
    %390 = vmatprep.subr.mxu0 0.0
    %391 = vmatpush1.msra.mxu0 0.0
    %392 = vmatprep.subr.mxu0 0.0
    %393 = vmatpush1.msra.mxu0 0.0
    %394 = vmatprep.subr.mxu0 0.0
    %395 = vmatpush1.msra.mxu0 0.0
    %396 = vmatprep.subr.mxu0 0.0
    %397 = vmatpush1.msra.mxu0 0.0
    %398 = vmatprep.subr.mxu0 0.0
    %399 = vmatpush1.msra.mxu0 0.0
    %400 = vmatprep.subr.mxu0 0.0
    %401 = vmatpush1.msra.mxu0 0.0
    %402 = vmatprep.subr.mxu0 0.0
    %403 = vmatpush1.msra.mxu0 0.0
    %404 = vmatprep.subr.mxu0 0.0
    %405 = vmatpush1.msra.mxu0 0.0
    %406 = vmatprep.subr.mxu0 0.0
    %407 = vmatpush1.msra.mxu0 0.0
    %408 = vmatprep.subr.mxu0 0.0
    %409 = vmatpush1.msra.mxu0 0.0
    %410 = vmatprep.subr.mxu0 0.0
    %411 = vmatpush1.msra.mxu0 0.0
    %412 = vmatprep.subr.mxu0 0.0
    %413 = vmatpush1.msra.mxu0 0.0
    %414 = vmatprep.subr.mxu0 0.0
    %415 = vmatpush1.msra.mxu0 0.0
    %416 = vmatprep.subr.mxu0 0.0
    %417 = vmatpush1.msra.mxu0 0.0
    %418 = vmatprep.subr.mxu0 0.0
    %419 = vmatpush1.msra.mxu0 0.0
    %420 = vmatprep.subr.mxu0 0.0
    %421 = vmatpush1.msra.mxu0 0.0
    %422 = vmatprep.subr.mxu0 0.0
    %423 = vmatpush1.msra.mxu0 0.0
    %424 = vmatprep.subr.mxu0 0.0
    %425 = vmatpush1.msra.mxu0 0.0
    %426 = vmatprep.subr.mxu0 0.0
    %427 = vmatpush1.msra.mxu0 0.0
    %428 = vmatprep.subr.mxu0 0.0
    %429 = vmatpush1.msra.mxu0 0.0
    %430 = vmatprep.subr.mxu0 0.0
    %431 = vmatpush1.msra.mxu0 0.0
    %432 = vmatprep.subr.mxu0 0.0
    %433 = vmatpush1.msra.mxu0 0.0
    %434 = vmatprep.subr.mxu0 0.0
    %435 = vmatpush1.msra.mxu0 0.0
    %436 = vmatprep.subr.mxu0 0.0
    %437 = vmatpush1.msra.mxu0 0.0
    %438 = vmatprep.subr.mxu0 0.0
    %439 = vmatpush1.msra.mxu0 0.0
    %440 = vmatprep.subr.mxu0 0.0
    %441 = vmatpush1.msra.mxu0 0.0
    %442 = vmatprep.subr.mxu0 0.0
    %443 = vmatpush1.msra.mxu0 0.0
    %444 = vmatprep.subr.mxu0 0.0
    %445 = vmatpush1.msra.mxu0 0.0
    %446 = vmatprep.subr.mxu0 0.0
    %447 = vmatpush1.msra.mxu0 0.0
    %448 = vmatprep.mubr.f32.mxu0 0.0
    %449 = vmatmul.mubr.f32.gmra.mrb[0].mxu0 %v382
    %v450 = vpop.f32.mrb[0].mxu0
    %v451 = vadd.f32 0.0, %v450
    %v452 = vpop.f32.mrb[0].mxu0
    %453 = vdwg.mxu0
    %v455 = vsel %vm188, %v379, 0
    %457 = vmatprep.subr.mxu0 0.0
    %458 = vmatpush1.msra.mxu0 %v177
    %459 = vmatprep.subr.mxu0 0.0
    %460 = vmatpush1.msra.mxu0 %v178
    %461 = vmatprep.subr.mxu0 0.0
    %462 = vmatpush1.msra.mxu0 %v179
    %463 = vmatprep.subr.mxu0 0.0
    %464 = vmatpush1.msra.mxu0 %v180
    %465 = vmatprep.subr.mxu0 0.0
    %466 = vmatpush1.msra.mxu0 0.0
    %467 = vmatprep.subr.mxu0 0.0
    %468 = vmatpush1.msra.mxu0 0.0
    %469 = vmatprep.subr.mxu0 0.0
    %470 = vmatpush1.msra.mxu0 0.0
    %471 = vmatprep.subr.mxu0 0.0
    %472 = vmatpush1.msra.mxu0 0.0
    %473 = vmatprep.subr.mxu0 0.0
    %474 = vmatpush1.msra.mxu0 0.0
    %475 = vmatprep.subr.mxu0 0.0
    %476 = vmatpush1.msra.mxu0 0.0
    %477 = vmatprep.subr.mxu0 0.0
    %478 = vmatpush1.msra.mxu0 0.0
    %479 = vmatprep.subr.mxu0 0.0
    %480 = vmatpush1.msra.mxu0 0.0
    %481 = vmatprep.subr.mxu0 0.0
    %482 = vmatpush1.msra.mxu0 0.0
    %483 = vmatprep.subr.mxu0 0.0
    %484 = vmatpush1.msra.mxu0 0.0
    %485 = vmatprep.subr.mxu0 0.0
    %486 = vmatpush1.msra.mxu0 0.0
    %487 = vmatprep.subr.mxu0 0.0
    %488 = vmatpush1.msra.mxu0 0.0
    %489 = vmatprep.subr.mxu0 0.0
    %490 = vmatpush1.msra.mxu0 0.0
    %491 = vmatprep.subr.mxu0 0.0
    %492 = vmatpush1.msra.mxu0 0.0
    %493 = vmatprep.subr.mxu0 0.0
    %494 = vmatpush1.msra.mxu0 0.0
    %495 = vmatprep.subr.mxu0 0.0
    %496 = vmatpush1.msra.mxu0 0.0
    %497 = vmatprep.subr.mxu0 0.0
    %498 = vmatpush1.msra.mxu0 0.0
    %499 = vmatprep.subr.mxu0 0.0
    %500 = vmatpush1.msra.mxu0 0.0
    %501 = vmatprep.subr.mxu0 0.0
    %502 = vmatpush1.msra.mxu0 0.0
    %503 = vmatprep.subr.mxu0 0.0
    %504 = vmatpush1.msra.mxu0 0.0
    %505 = vmatprep.subr.mxu0 0.0
    %506 = vmatpush1.msra.mxu0 0.0
    %507 = vmatprep.subr.mxu0 0.0
    %508 = vmatpush1.msra.mxu0 0.0
    %509 = vmatprep.subr.mxu0 0.0
    %510 = vmatpush1.msra.mxu0 0.0
    %511 = vmatprep.subr.mxu0 0.0
    %512 = vmatpush1.msra.mxu0 0.0
    %513 = vmatprep.subr.mxu0 0.0
    %514 = vmatpush1.msra.mxu0 0.0
    %515 = vmatprep.subr.mxu0 0.0
    %516 = vmatpush1.msra.mxu0 0.0
    %517 = vmatprep.subr.mxu0 0.0
    %518 = vmatpush1.msra.mxu0 0.0
    %519 = vmatprep.subr.mxu0 0.0
    %520 = vmatpush1.msra.mxu0 0.0
    %521 = vmatprep.mubr.f32.mxu0 0.0
    %522 = vmatmul.mubr.f32.gmra.mrb[0].mxu0 %v455
    %v523 = vpop.f32.mrb[0].mxu0
    %v524 = vadd.f32 %v451, %v523
    %v525 = vpop.f32.mrb[0].mxu0
    %526 = vdwg.mxu0
    %v527 = vlaneseq
    %v528 = vshrl.u32 %v527, 7
    %v529 = vsub.s32 1, %v528
    %v530 = vrot.slane %v82, %v529
    %v531 = vadd.f32 %v524, %v530
    %v532 = vmax.f32 %v531, 0.0
    %s533 = scalar_lea.vmem %s1, 8
    %v534 = vld [vmem:[%s533] sm:$0xff]
    %s535 = scalar_lea.vmem %s2, 8
    %v536 = vld [vmem:[%s535] sm:$0xff]
    %s537 = scalar_lea.vmem %s3, 8
    %v538 = vld [vmem:[%s537] sm:$0xff]
    %540 = vrot.lane.b32.xlu0 %v174, 96
    %v541 = vpop.permute.xlu0 %540
    %v542 = vsel %vm188, %v174, 0
    %v544 = vsel %vm188, %v541, 0
    %546 = vmatprep.subr.mxu0 0.0
    %547 = vmatpush1.xpose.msra.mxu0 %v544
    %548 = vmatprep.subr.mxu0 0.0
    %549 = vmatpush1.xpose.msra.mxu0 0.0
    %550 = vmatprep.subr.mxu0 0.0
    %551 = vmatpush1.xpose.msra.mxu0 0.0
    %552 = vmatprep.subr.mxu0 0.0
    %553 = vmatpush1.xpose.msra.mxu0 0.0
    %554 = vmatprep.subr.mxu0 0.0
    %555 = vmatpush1.xpose.msra.mxu0 0.0
    %556 = vmatprep.subr.mxu0 0.0
    %557 = vmatpush1.xpose.msra.mxu0 0.0
    %558 = vmatprep.subr.mxu0 0.0
    %559 = vmatpush1.xpose.msra.mxu0 0.0
    %560 = vmatprep.subr.mxu0 0.0
    %561 = vmatpush1.xpose.msra.mxu0 0.0
    %562 = vmatprep.subr.mxu0 0.0
    %563 = vmatpush1.xpose.msra.mxu0 0.0
    %564 = vmatprep.subr.mxu0 0.0
    %565 = vmatpush1.xpose.msra.mxu0 0.0
    %566 = vmatprep.subr.mxu0 0.0
    %567 = vmatpush1.xpose.msra.mxu0 0.0
    %568 = vmatprep.subr.mxu0 0.0
    %569 = vmatpush1.xpose.msra.mxu0 0.0
    %570 = vmatprep.subr.mxu0 0.0
    %571 = vmatpush1.xpose.msra.mxu0 0.0
    %572 = vmatprep.subr.mxu0 0.0
    %573 = vmatpush1.xpose.msra.mxu0 0.0
    %574 = vmatprep.subr.mxu0 0.0
    %575 = vmatpush1.xpose.msra.mxu0 0.0
    %576 = vmatprep.subr.mxu0 0.0
    %577 = vmatpush1.xpose.msra.mxu0 0.0
    %578 = vmatprep.subr.mxu0 0.0
    %579 = vmatpush1.xpose.msra.mxu0 0.0
    %580 = vmatprep.subr.mxu0 0.0
    %581 = vmatpush1.xpose.msra.mxu0 0.0
    %582 = vmatprep.subr.mxu0 0.0
    %583 = vmatpush1.xpose.msra.mxu0 0.0
    %584 = vmatprep.subr.mxu0 0.0
    %585 = vmatpush1.xpose.msra.mxu0 0.0
    %586 = vmatprep.subr.mxu0 0.0
    %587 = vmatpush1.xpose.msra.mxu0 0.0
    %588 = vmatprep.subr.mxu0 0.0
    %589 = vmatpush1.xpose.msra.mxu0 0.0
    %590 = vmatprep.subr.mxu0 0.0
    %591 = vmatpush1.xpose.msra.mxu0 0.0
    %592 = vmatprep.subr.mxu0 0.0
    %593 = vmatpush1.xpose.msra.mxu0 0.0
    %594 = vmatprep.subr.mxu0 0.0
    %595 = vmatpush1.xpose.msra.mxu0 0.0
    %596 = vmatprep.subr.mxu0 0.0
    %597 = vmatpush1.xpose.msra.mxu0 0.0
    %598 = vmatprep.subr.mxu0 0.0
    %599 = vmatpush1.xpose.msra.mxu0 0.0
    %600 = vmatprep.subr.mxu0 0.0
    %601 = vmatpush1.xpose.msra.mxu0 0.0
    %602 = vmatprep.subr.mxu0 0.0
    %603 = vmatpush1.xpose.msra.mxu0 0.0
    %604 = vmatprep.subr.mxu0 0.0
    %605 = vmatpush1.xpose.msra.mxu0 0.0
    %606 = vmatprep.subr.mxu0 0.0
    %607 = vmatpush1.xpose.msra.mxu0 0.0
    %608 = vmatprep.subr.mxu0 0.0
    %609 = vmatpush1.xpose.msra.mxu0 0.0
    %610 = vmatprep.mubr.f32.mxu0 0.0
    %611 = vmatmul.mubr.f32.gmra.mrb[0].mxu0 %v542
    %v612 = vpop.f32.mrb[0].mxu0
    %v613 = vadd.f32 0.0, %v612
    %v614 = vpop.f32.mrb[0].mxu0
    %615 = vdwg.mxu0
    %v616 = vadd.f32 %v536, 1.0
    %v617 = vrcp.pop %v616
    %v618 = vmul.f32 %v617, 0.17677669
    %v619 = vmul.f32 %v618, %v613
    %vm620 = vcmp.ne.s32.totalorder %v538, 0
    %v621 = vsel %vm620, -1e+30, %v619
    %v622 = vsel %vm269, %v621, -inf
    %623 = vmax.xlane.f32.xlu0 %v622
    %v624 = vpop.xlane.xlu0 %623
    %v625 = vsub.f32 %v621, %v624
    %v626 = vmul.f32 %v625, 1.442695
    %v627 = vpow.pop %v626
    %v628 = vsel %vm269, %v627, 0.0
    %629 = vadd.xlane.f32.xlu0 %v628
    %v630 = vpop.xlane.xlu0 %629
    %v631 = vrcp.pop %v630
    %v632 = vmul.f32 %v627, %v631
    %vm633 = vcmp.gt.f32.partialorder %v624, -1e+29
    %v634 = vsel %vm633, 1, 0
    %vm635 = vcmp.eq.s32.totalorder %v634, 1
    %v636 = vsel %vm635, %v632, 0.0
    %637 = vrot.lane.b32.xlu0 %v174, 64
    %v638 = vpop.permute.xlu0 %637
    %v641 = vsel %vm269, %v636, 0
    %643 = vmatprep.subr.mxu0 0.0
    %644 = vmatpush1.msra.mxu0 %v638
    %645 = vmatprep.subr.mxu0 0.0
    %646 = vmatpush1.msra.mxu0 0.0
    %647 = vmatprep.subr.mxu0 0.0
    %648 = vmatpush1.msra.mxu0 0.0
    %649 = vmatprep.subr.mxu0 0.0
    %650 = vmatpush1.msra.mxu0 0.0
    %651 = vmatprep.subr.mxu0 0.0
    %652 = vmatpush1.msra.mxu0 0.0
    %653 = vmatprep.subr.mxu0 0.0
    %654 = vmatpush1.msra.mxu0 0.0
    %655 = vmatprep.subr.mxu0 0.0
    %656 = vmatpush1.msra.mxu0 0.0
    %657 = vmatprep.subr.mxu0 0.0
    %658 = vmatpush1.msra.mxu0 0.0
    %659 = vmatprep.subr.mxu0 0.0
    %660 = vmatpush1.msra.mxu0 0.0
    %661 = vmatprep.subr.mxu0 0.0
    %662 = vmatpush1.msra.mxu0 0.0
    %663 = vmatprep.subr.mxu0 0.0
    %664 = vmatpush1.msra.mxu0 0.0
    %665 = vmatprep.subr.mxu0 0.0
    %666 = vmatpush1.msra.mxu0 0.0
    %667 = vmatprep.subr.mxu0 0.0
    %668 = vmatpush1.msra.mxu0 0.0
    %669 = vmatprep.subr.mxu0 0.0
    %670 = vmatpush1.msra.mxu0 0.0
    %671 = vmatprep.subr.mxu0 0.0
    %672 = vmatpush1.msra.mxu0 0.0
    %673 = vmatprep.subr.mxu0 0.0
    %674 = vmatpush1.msra.mxu0 0.0
    %675 = vmatprep.subr.mxu0 0.0
    %676 = vmatpush1.msra.mxu0 0.0
    %677 = vmatprep.subr.mxu0 0.0
    %678 = vmatpush1.msra.mxu0 0.0
    %679 = vmatprep.subr.mxu0 0.0
    %680 = vmatpush1.msra.mxu0 0.0
    %681 = vmatprep.subr.mxu0 0.0
    %682 = vmatpush1.msra.mxu0 0.0
    %683 = vmatprep.subr.mxu0 0.0
    %684 = vmatpush1.msra.mxu0 0.0
    %685 = vmatprep.subr.mxu0 0.0
    %686 = vmatpush1.msra.mxu0 0.0
    %687 = vmatprep.subr.mxu0 0.0
    %688 = vmatpush1.msra.mxu0 0.0
    %689 = vmatprep.subr.mxu0 0.0
    %690 = vmatpush1.msra.mxu0 0.0
    %691 = vmatprep.subr.mxu0 0.0
    %692 = vmatpush1.msra.mxu0 0.0
    %693 = vmatprep.subr.mxu0 0.0
    %694 = vmatpush1.msra.mxu0 0.0
    %695 = vmatprep.subr.mxu0 0.0
    %696 = vmatpush1.msra.mxu0 0.0
    %697 = vmatprep.subr.mxu0 0.0
    %698 = vmatpush1.msra.mxu0 0.0
    %699 = vmatprep.subr.mxu0 0.0
    %700 = vmatpush1.msra.mxu0 0.0
    %701 = vmatprep.subr.mxu0 0.0
    %702 = vmatpush1.msra.mxu0 0.0
    %703 = vmatprep.subr.mxu0 0.0
    %704 = vmatpush1.msra.mxu0 0.0
    %705 = vmatprep.subr.mxu0 0.0
    %706 = vmatpush1.msra.mxu0 0.0
    %707 = vmatprep.mubr.f32.mxu0 0.0
    %708 = vmatmul.mubr.f32.gmra.mrb[0].mxu0 %v641
    %v709 = vpop.f32.mrb[0].mxu0
    %v710 = vadd.f32 0.0, %v709
    %v711 = vpop.f32.mrb[0].mxu0
    %712 = vdwg.mxu0
    %v713 = vmul.f32 %v636, %v534
    %v714 = vsel %vm269, %v713, 0.0
    %715 = vadd.xlane.f32.xlu0 %v714
    %v716 = vpop.xlane.xlu0 %715
    %v717 = vsel %vm269, %v636, 0.0
    %718 = vadd.xlane.f32.xlu0 %v717
    %v719 = vpop.xlane.xlu0 %718
    %v720 = vmul.f32 %v716, %v371
    %v721 = vmul.f32 %v719, %v376
    %v722 = vadd.f32 %v720, %v721
    %v723 = vtanh.pop %v710
    %v724 = vtanh.pop %v722
    %v726 = vsel %vm269, %v724, 0
    %728 = vmatprep.subr.mxu0 0.0
    %729 = vmatpush1.msra.mxu0 %v181
    %730 = vmatprep.subr.mxu0 0.0
    %731 = vmatpush1.msra.mxu0 0.0
    %732 = vmatprep.subr.mxu0 0.0
    %733 = vmatpush1.msra.mxu0 0.0
    %734 = vmatprep.subr.mxu0 0.0
    %735 = vmatpush1.msra.mxu0 0.0
    %736 = vmatprep.subr.mxu0 0.0
    %737 = vmatpush1.msra.mxu0 0.0
    %738 = vmatprep.subr.mxu0 0.0
    %739 = vmatpush1.msra.mxu0 0.0
    %740 = vmatprep.subr.mxu0 0.0
    %741 = vmatpush1.msra.mxu0 0.0
    %742 = vmatprep.subr.mxu0 0.0
    %743 = vmatpush1.msra.mxu0 0.0
    %744 = vmatprep.subr.mxu0 0.0
    %745 = vmatpush1.msra.mxu0 0.0
    %746 = vmatprep.subr.mxu0 0.0
    %747 = vmatpush1.msra.mxu0 0.0
    %748 = vmatprep.subr.mxu0 0.0
    %749 = vmatpush1.msra.mxu0 0.0
    %750 = vmatprep.subr.mxu0 0.0
    %751 = vmatpush1.msra.mxu0 0.0
    %752 = vmatprep.subr.mxu0 0.0
    %753 = vmatpush1.msra.mxu0 0.0
    %754 = vmatprep.subr.mxu0 0.0
    %755 = vmatpush1.msra.mxu0 0.0
    %756 = vmatprep.subr.mxu0 0.0
    %757 = vmatpush1.msra.mxu0 0.0
    %758 = vmatprep.subr.mxu0 0.0
    %759 = vmatpush1.msra.mxu0 0.0
    %760 = vmatprep.subr.mxu0 0.0
    %761 = vmatpush1.msra.mxu0 0.0
    %762 = vmatprep.subr.mxu0 0.0
    %763 = vmatpush1.msra.mxu0 0.0
    %764 = vmatprep.subr.mxu0 0.0
    %765 = vmatpush1.msra.mxu0 0.0
    %766 = vmatprep.subr.mxu0 0.0
    %767 = vmatpush1.msra.mxu0 0.0
    %768 = vmatprep.subr.mxu0 0.0
    %769 = vmatpush1.msra.mxu0 0.0
    %770 = vmatprep.subr.mxu0 0.0
    %771 = vmatpush1.msra.mxu0 0.0
    %772 = vmatprep.subr.mxu0 0.0
    %773 = vmatpush1.msra.mxu0 0.0
    %774 = vmatprep.subr.mxu0 0.0
    %775 = vmatpush1.msra.mxu0 0.0
    %776 = vmatprep.subr.mxu0 0.0
    %777 = vmatpush1.msra.mxu0 0.0
    %778 = vmatprep.subr.mxu0 0.0
    %779 = vmatpush1.msra.mxu0 0.0
    %780 = vmatprep.subr.mxu0 0.0
    %781 = vmatpush1.msra.mxu0 0.0
    %782 = vmatprep.subr.mxu0 0.0
    %783 = vmatpush1.msra.mxu0 0.0
    %784 = vmatprep.subr.mxu0 0.0
    %785 = vmatpush1.msra.mxu0 0.0
    %786 = vmatprep.subr.mxu0 0.0
    %787 = vmatpush1.msra.mxu0 0.0
    %788 = vmatprep.subr.mxu0 0.0
    %789 = vmatpush1.msra.mxu0 0.0
    %790 = vmatprep.subr.mxu0 0.0
    %791 = vmatpush1.msra.mxu0 0.0
    %792 = vmatprep.mubr.f32.mxu0 0.0
    %793 = vmatmul.mubr.f32.gmra.mrb[0].mxu0 %v726
    %v794 = vpop.f32.mrb[0].mxu0
    %v795 = vadd.f32 0.0, %v794
    %v796 = vpop.f32.mrb[0].mxu0
    %797 = vdwg.mxu0
    %v799 = vsel %vm188, %v723, 0
    %801 = vmatprep.subr.mxu0 0.0
    %802 = vmatpush1.msra.mxu0 %v177
    %803 = vmatprep.subr.mxu0 0.0
    %804 = vmatpush1.msra.mxu0 %v178
    %805 = vmatprep.subr.mxu0 0.0
    %806 = vmatpush1.msra.mxu0 %v179
    %807 = vmatprep.subr.mxu0 0.0
    %808 = vmatpush1.msra.mxu0 %v180
    %809 = vmatprep.subr.mxu0 0.0
    %810 = vmatpush1.msra.mxu0 0.0
    %811 = vmatprep.subr.mxu0 0.0
    %812 = vmatpush1.msra.mxu0 0.0
    %813 = vmatprep.subr.mxu0 0.0
    %814 = vmatpush1.msra.mxu0 0.0
    %815 = vmatprep.subr.mxu0 0.0
    %816 = vmatpush1.msra.mxu0 0.0
    %817 = vmatprep.subr.mxu0 0.0
    %818 = vmatpush1.msra.mxu0 0.0
    %819 = vmatprep.subr.mxu0 0.0
    %820 = vmatpush1.msra.mxu0 0.0
    %821 = vmatprep.subr.mxu0 0.0
    %822 = vmatpush1.msra.mxu0 0.0
    %823 = vmatprep.subr.mxu0 0.0
    %824 = vmatpush1.msra.mxu0 0.0
    %825 = vmatprep.subr.mxu0 0.0
    %826 = vmatpush1.msra.mxu0 0.0
    %827 = vmatprep.subr.mxu0 0.0
    %828 = vmatpush1.msra.mxu0 0.0
    %829 = vmatprep.subr.mxu0 0.0
    %830 = vmatpush1.msra.mxu0 0.0
    %831 = vmatprep.subr.mxu0 0.0
    %832 = vmatpush1.msra.mxu0 0.0
    %833 = vmatprep.subr.mxu0 0.0
    %834 = vmatpush1.msra.mxu0 0.0
    %835 = vmatprep.subr.mxu0 0.0
    %836 = vmatpush1.msra.mxu0 0.0
    %837 = vmatprep.subr.mxu0 0.0
    %838 = vmatpush1.msra.mxu0 0.0
    %839 = vmatprep.subr.mxu0 0.0
    %840 = vmatpush1.msra.mxu0 0.0
    %841 = vmatprep.subr.mxu0 0.0
    %842 = vmatpush1.msra.mxu0 0.0
    %843 = vmatprep.subr.mxu0 0.0
    %844 = vmatpush1.msra.mxu0 0.0
    %845 = vmatprep.subr.mxu0 0.0
    %846 = vmatpush1.msra.mxu0 0.0
    %847 = vmatprep.subr.mxu0 0.0
    %848 = vmatpush1.msra.mxu0 0.0
    %849 = vmatprep.subr.mxu0 0.0
    %850 = vmatpush1.msra.mxu0 0.0
    %851 = vmatprep.subr.mxu0 0.0
    %852 = vmatpush1.msra.mxu0 0.0
    %853 = vmatprep.subr.mxu0 0.0
    %854 = vmatpush1.msra.mxu0 0.0
    %855 = vmatprep.subr.mxu0 0.0
    %856 = vmatpush1.msra.mxu0 0.0
    %857 = vmatprep.subr.mxu0 0.0
    %858 = vmatpush1.msra.mxu0 0.0
    %859 = vmatprep.subr.mxu0 0.0
    %860 = vmatpush1.msra.mxu0 0.0
    %861 = vmatprep.subr.mxu0 0.0
    %862 = vmatpush1.msra.mxu0 0.0
    %863 = vmatprep.subr.mxu0 0.0
    %864 = vmatpush1.msra.mxu0 0.0
    %865 = vmatprep.mubr.f32.mxu0 0.0
    %866 = vmatmul.mubr.f32.gmra.mrb[0].mxu0 %v799
    %v867 = vpop.f32.mrb[0].mxu0
    %v868 = vadd.f32 %v795, %v867
    %v869 = vpop.f32.mrb[0].mxu0
    %870 = vdwg.mxu0
    %v871 = vadd.f32 %v868, %v530
    %v872 = vmax.f32 %v871, 0.0
    %vm873 = vcmask 523264
    %v874 = vsel %vm873, %v532, 0.0
    %v875 = vsel %vm873, %v872, 0.0
    %v876 = vadd.f32 %v874, %v875
    %v877 = vrot.slane %v876, 4
    %v878 = vadd.f32 %v876, %v877
    %v879 = vrot.slane %v878, 2
    %v880 = vadd.f32 %v878, %v879
    %v881 = vrot.slane %v880, 1
    %v882 = vadd.f32 %v880, %v881
    %v883 = vrcp.pop 16.0
    %v884 = vmul.f32 %v882, %v883
    %v885 = vsub.f32 %v532, %v884
    %v886 = vsub.f32 %v872, %v884
    %v887 = vmul.f32 %v885, %v885
    %v888 = vmul.f32 %v886, %v886
    %v889 = vsel %vm873, %v887, 0.0
    %v890 = vsel %vm873, %v888, 0.0
    %v891 = vadd.f32 %v889, %v890
    %v892 = vrot.slane %v891, 4
    %v893 = vadd.f32 %v891, %v892
    %v894 = vrot.slane %v893, 2
    %v895 = vadd.f32 %v893, %v894
    %v896 = vrot.slane %v895, 1
    %v897 = vadd.f32 %v895, %v896
    %v898 = vmul.f32 %v897, %v883
    %v899 = vadd.f32 %v898, 1e-05
    %v900 = vrsqrt.pop %v899
    %v901 = vmul.f32 %v82, %v900
    %v902 = vmul.f32 %v884, %v901
    %v904 = vrot.slane %v902, 7
    %v906 = vsub.f32 %v82, %v904
    %v907 = vlaneseq
    %v908 = vshrl.u32 %v907, 7
    %v909 = vsub.s32 2, %v908
    %v910 = vrot.slane %v901, %v909
    %v911 = vmul.f32 %v532, %v910
    %v912 = vmul.f32 %v872, %v910
    %v913 = vlaneseq
    %v914 = vshrl.u32 %v913, 7
    %v915 = vsub.s32 3, %v914
    %v916 = vrot.slane %v906, %v915
    %v917 = vadd.f32 %v911, %v916
    %v918 = vadd.f32 %v912, %v916
    %v919 = vld [vmem:[#allocation6] sm:$0xff]
    %v920 = vld [vmem:[#allocation6 + $0x8] sm:$0xff]
    %v921 = vld [vmem:[#allocation6 + $0x10] sm:$0xff]
    %v922 = vld [vmem:[#allocation6 + $0x18] sm:$0xff]
    %v923 = vld [vmem:[#allocation6 + $0x20] sm:$0xff]
    %v924 = vld [vmem:[#allocation6 + $0x28] sm:$0xff]
    %v925 = vld [vmem:[#allocation6 + $0x30] sm:$0xff]
    %v926 = vld [vmem:[#allocation6 + $0x38] sm:$0xff]
    %v927 = vlaneseq
    %v928 = vshrl.u32 %v927, 7
    %v929 = vsub.s32 4, %v928
    %v930 = vrot.slane %v82, %v929
    %v932 = vsel %vm873, %v917, 0
    %v935 = vsel %vm873, %v918, 0
    %937 = vmatprep.subr.mxu0 0.0
    %938 = vmatpush1.msra.mxu0 %v919
    %939 = vmatprep.subr.mxu0 0.0
    %940 = vmatpush1.msra.mxu0 %v920
    %941 = vmatprep.subr.mxu0 0.0
    %942 = vmatpush1.msra.mxu0 %v921
    %943 = vmatprep.subr.mxu0 0.0
    %944 = vmatpush1.msra.mxu0 %v922
    %945 = vmatprep.subr.mxu0 0.0
    %946 = vmatpush1.msra.mxu0 %v923
    %947 = vmatprep.subr.mxu0 0.0
    %948 = vmatpush1.msra.mxu0 %v924
    %949 = vmatprep.subr.mxu0 0.0
    %950 = vmatpush1.msra.mxu0 %v925
    %951 = vmatprep.subr.mxu0 0.0
    %952 = vmatpush1.msra.mxu0 %v926
    %953 = vmatprep.subr.mxu0 0.0
    %954 = vmatpush1.msra.mxu0 0.0
    %955 = vmatprep.subr.mxu0 0.0
    %956 = vmatpush1.msra.mxu0 0.0
    %957 = vmatprep.subr.mxu0 0.0
    %958 = vmatpush1.msra.mxu0 0.0
    %959 = vmatprep.subr.mxu0 0.0
    %960 = vmatpush1.msra.mxu0 0.0
    %961 = vmatprep.subr.mxu0 0.0
    %962 = vmatpush1.msra.mxu0 0.0
    %963 = vmatprep.subr.mxu0 0.0
    %964 = vmatpush1.msra.mxu0 0.0
    %965 = vmatprep.subr.mxu0 0.0
    %966 = vmatpush1.msra.mxu0 0.0
    %967 = vmatprep.subr.mxu0 0.0
    %968 = vmatpush1.msra.mxu0 0.0
    %969 = vmatprep.subr.mxu0 0.0
    %970 = vmatpush1.msra.mxu0 0.0
    %971 = vmatprep.subr.mxu0 0.0
    %972 = vmatpush1.msra.mxu0 0.0
    %973 = vmatprep.subr.mxu0 0.0
    %974 = vmatpush1.msra.mxu0 0.0
    %975 = vmatprep.subr.mxu0 0.0
    %976 = vmatpush1.msra.mxu0 0.0
    %977 = vmatprep.subr.mxu0 0.0
    %978 = vmatpush1.msra.mxu0 0.0
    %979 = vmatprep.subr.mxu0 0.0
    %980 = vmatpush1.msra.mxu0 0.0
    %981 = vmatprep.subr.mxu0 0.0
    %982 = vmatpush1.msra.mxu0 0.0
    %983 = vmatprep.subr.mxu0 0.0
    %984 = vmatpush1.msra.mxu0 0.0
    %985 = vmatprep.subr.mxu0 0.0
    %986 = vmatpush1.msra.mxu0 0.0
    %987 = vmatprep.subr.mxu0 0.0
    %988 = vmatpush1.msra.mxu0 0.0
    %989 = vmatprep.subr.mxu0 0.0
    %990 = vmatpush1.msra.mxu0 0.0
    %991 = vmatprep.subr.mxu0 0.0
    %992 = vmatpush1.msra.mxu0 0.0
    %993 = vmatprep.subr.mxu0 0.0
    %994 = vmatpush1.msra.mxu0 0.0
    %995 = vmatprep.subr.mxu0 0.0
    %996 = vmatpush1.msra.mxu0 0.0
    %997 = vmatprep.subr.mxu0 0.0
    %998 = vmatpush1.msra.mxu0 0.0
    %999 = vmatprep.subr.mxu0 0.0
    %1000 = vmatpush1.msra.mxu0 0.0
    %1001 = vmatprep.mubr.f32.mxu0 0.0
    %1002 = vmatmul.mubr.f32.gmra.mrb[0].mxu0 %v932
    %v1003 = vpop.f32.mrb[0].mxu0
    %v1004 = vadd.f32 %v930, %v1003
    %v1005 = vpop.f32.mrb[0].mxu0
    %1006 = vmatprep.mubr.f32.mxu0 0.0
    %1007 = vmatmul.mubr.f32.gmra.mrb[0].mxu0 %v935
    %v1008 = vpop.f32.mrb[0].mxu0
    %v1009 = vadd.f32 %v930, %v1008
    %v1010 = vpop.f32.mrb[0].mxu0
    %1011 = vdwg.mxu0
    %1012 = vst [vmem:[%s8] sm:$0xff] %v1004
    %1013 = vst [vmem:[%s8 + $0x8] sm:$0xff] %v1009
    // Predicated region
    $region50: #{graph_classifier_forward.1} parent=1 // pred_check
      _
    $region51: #{graph_classifier_forward.1} parent=1 // pred_check_branch
      %1015 = sbr.rel (0) target = $region53
    $region52: #{graph_classifier_forward.1} parent=1 // pred_region
      _
    $region53: #{graph_classifier_forward.1} parent=1 // pred_fallthru
      _
    // Predicated region
    $region54: #{graph_classifier_forward.1} parent=1 // pred_check
      _
    $region55: #{graph_classifier_forward.1} parent=1 // pred_check_branch
      %1017 = sbr.rel (0) target = $region57
    $region56: #{graph_classifier_forward.1} parent=1 // pred_region
      _
    $region57: #{graph_classifier_forward.1} parent=1 // pred_fallthru
      _
    %1018 = vsyncpa [#allocation3], 1
    %1019 = vsyncpa [#allocation5], 1
    %1020 = vsyncpa [#allocation8], 1

</llo_original>
